<compile_context>
chip_gen: v6e
topology: v6e:2x2x1
jax: 0.10.0
libtpu: 0.0.40
codegen_flags: <defaults>
</compile_context>

<pallas_src>
import functools

import jax
import jax.numpy as jnp
from jax.experimental import pallas as pl
from jax.experimental.pallas import tpu as pltpu


def _round_up(x, m):
    return ((x + m - 1) // m) * m


def _device_config():
    """Per-generation (tile_m, vmem_limit_bytes, tensorcores_per_chip)."""
    kind = ""
    try:
        kind = jax.devices()[0].device_kind.lower()
    except Exception:
        pass
    if "v5 lite" in kind or "v5lite" in kind or "v5e" in kind:
        # Bigger tiles amortize the ~0.35 us per-grid-step overhead; plenty of VMEM.
        return 256, 64 * 1024 * 1024, 1
    if "v6" in kind:
        # v6e: 128 MiB VMEM -> push the tile and the scoped limit up.
        return 512, 80 * 1024 * 1024, 1
    if "v7" in kind:
        # v7x: only 64 MiB VMEM per TensorCore, 2 TCs per chip.
        return 256, 44 * 1024 * 1024, 2
    return 256, 48 * 1024 * 1024, 1


def _decoder_kernel(feat_ref, mix_ref,
                    w1_ref, b1_ref, w2_ref, b2_ref, w3_ref, b3_ref,
                    out_ref, *, row_chunks):
    # feat_ref: (tm, D) f32; mix_ref/out_ref: (tm, Fp); weights bf16, biases f32.
    cd = w1_ref.dtype
    tm = feat_ref.shape[0]
    rows = tm // row_chunks

    # Static unroll over independent row halves -> two data-independent chains
    # the scheduler can interleave (GEMMs of one half under the VPU/EUP epilogue
    # of the other). row_chunks == 1 for small tiles.
    for c in range(row_chunks):
        sl = pl.ds(c * rows, rows)

        # Cast f32 -> bf16 in-kernel (VPU, hidden under MXU slack) instead of a
        # wrapper-side XLA cast that would cost an extra HBM pass.
        x = feat_ref[sl, :].astype(cd)                                       # (rows, D)

        h1 = jnp.dot(x, w1_ref[...], preferred_element_type=jnp.float32)
        h1 = jnp.maximum(h1 + b1_ref[...], 0.0)                              # f32 ReLU
        # Dropout(0.1) -> identity at inference time.

        h2 = jnp.dot(h1.astype(cd), w2_ref[...], preferred_element_type=jnp.float32)
        h2 = jnp.maximum(h2 + b2_ref[...], 0.0)                              # f32 ReLU
        # Dropout(0.1) -> identity at inference time.

        logits = jnp.dot(h2.astype(cd), w3_ref[...], preferred_element_type=jnp.float32)
        mask = jax.nn.sigmoid(logits + b3_ref[...])                          # (rows, Fp) f32

        # Lane-dense (last dim = Fp, multiple of 128) multiply + unmasked store.
        out_ref[sl, :] = (mix_ref[sl, :].astype(jnp.float32) * mask).astype(out_ref.dtype)


def linear_decoder(features, mixture_spec, params, *, tile_m=None,
                   compute_dtype=jnp.bfloat16):
    """features: (B, T, D); mixture_spec: (B, F, T); returns (B, F, T)."""
    B, T, D = features.shape
    H = params["w2"].shape[1]
    F_out = params["w3"].shape[1]
    assert mixture_spec.shape == (B, F_out, T)

    tm_default, vmem_limit, n_cores = _device_config()
    if tile_m is None:
        tile_m = tm_default

    M = B * T
    tm = min(tile_m, _round_up(M, 8))
    if n_cores > 1 and M > 2 * 8:
        # v7x: guarantee >= n_cores grid steps so the "parallel" axis actually
        # shards across both TensorCores.
        tm = min(tm, _round_up(pl.cdiv(M, n_cores), 8))
    if tm > M:
        tm = M                      # single block equal to full dim (always legal)
    grid_m = pl.cdiv(M, tm)         # no jnp.pad: edge block is a partial block

    row_chunks = 2 if (tm >= 256 and tm % 16 == 0) else 1

    # Lane-align hidden / output widths to 128. Zero padding is exact:
    # padded h2 columns are relu(0 + 0) = 0 and padded w3 rows are 0.
    Hp = _round_up(H, 128)
    Fp = _round_up(F_out, 128)

    # Flatten (B, T) -> M. Features keep their original dtype (cast in-kernel).
    feat_flat = features.reshape(M, D)
    # Lane-dense mixture layout (last dim = F); the pad fuses with this transpose copy.
    mix_flat = jnp.transpose(mixture_spec, (0, 2, 1)).reshape(M, F_out)
    if Fp != F_out:
        mix_flat = jnp.pad(mix_flat, ((0, 0), (0, Fp - F_out)))

    # bf16 matmul operands (f32 accumulation in-kernel); biases stay f32.
    w1 = params["w1"].astype(compute_dtype)
    w2 = params["w2"].astype(compute_dtype)
    w3 = params["w3"].astype(compute_dtype)
    b1 = params["b1"].astype(jnp.float32)
    b2 = params["b2"].astype(jnp.float32)
    b3 = params["b3"].astype(jnp.float32)
    if Hp != H:
        w2 = jnp.pad(w2, ((0, 0), (0, Hp - H)))
        b2 = jnp.pad(b2, ((0, 0), (0, Hp - H)))
        w3 = jnp.pad(w3, ((0, Hp - H), (0, 0)))
    if Fp != F_out:
        w3 = jnp.pad(w3, ((0, 0), (0, Fp - F_out)))
        b3 = jnp.pad(b3, ((0, 0), (0, Fp - F_out)))

    out_dtype = mixture_spec.dtype
    # VMEM-resident (constant-index) specs. TODO(synk): on v7x, pipeline_mode=
    # pl.Buffered(1) here would halve the resident-weight VMEM footprint.
    resident = lambda shape: pl.BlockSpec(shape, lambda i: (0, 0))

    f_item = jnp.dtype(features.dtype).itemsize
    w_item = jnp.dtype(compute_dtype).itemsize
    o_item = jnp.dtype(out_dtype).itemsize
    cost = pl.CostEstimate(
        flops=2 * M * (D * D + D * Hp + Hp * Fp),
        transcendentals=M * Fp,                                   # sigmoid
        bytes_accessed=(M * D * f_item                            # features
                        + (D * D + D * Hp + Hp * Fp) * w_item     # weights
                        + (D + Hp + Fp) * 4                       # biases
                        + 2 * M * Fp * o_item),                   # mixture + output
    )

    out_flat = pl.pallas_call(
        functools.partial(_decoder_kernel, row_chunks=row_chunks),
        out_shape=jax.ShapeDtypeStruct((M, Fp), out_dtype),
        grid_spec=pltpu.PrefetchScalarGridSpec(
            num_scalar_prefetch=0,
            grid=(grid_m,),
            in_specs=[
                pl.BlockSpec((tm, D), lambda i: (i, 0)),         # features, M tiles
                pl.BlockSpec((tm, Fp), lambda i: (i, 0)),        # mixture,  M tiles
                resident((D, D)), resident((1, D)),              # layer 1
                resident((D, Hp)), resident((1, Hp)),            # layer 2
                resident((Hp, Fp)), resident((1, Fp)),           # layer 3
            ],
            out_specs=pl.BlockSpec((tm, Fp), lambda i: (i, 0)),
        ),
        compiler_params=pltpu.CompilerParams(
            # M tiles are independent -> shard across TensorCores (v7x megacore).
            dimension_semantics=("parallel",),
            vmem_limit_bytes=vmem_limit,
        ),
        cost_estimate=cost,
    )(feat_flat, mix_flat, w1, b1, w2, b2, w3, b3)

    # Drop lane padding and restore the caller-visible (B, F, T) layout.
    # TODO(synk): if the consumer can accept (B, T, F), drop this transpose pass.
    mask_times_mix = out_flat[:, :F_out].reshape(B, T, F_out)
    return jnp.transpose(mask_times_mix, (0, 2, 1))


def init_params(key, input_dim, output_dim):
    """Deterministic synthetic init; weights stored as (in, out) so kernel does x @ W + b."""
    hidden = input_dim // 2
    k1, k2, k3, k4, k5, k6 = jax.random.split(key, 6)

    def lin(kw, kb, fan_in, fan_out):
        bound = 1.0 / jnp.sqrt(fan_in)
        w = jax.random.uniform(kw, (fan_in, fan_out), jnp.float32, -bound, bound)
        b = jax.random.uniform(kb, (1, fan_out), jnp.float32, -bound, bound)
        return w, b

    w1, b1 = lin(k1, k2, input_dim, input_dim)
    w2, b2 = lin(k3, k4, input_dim, hidden)
    w3, b3 = lin(k5, k6, hidden, output_dim)
    return {"w1": w1, "b1": b1, "w2": w2, "b2": b2, "w3": w3, "b3": b3}


def reference(features, mixture_spec, params, compute_dtype=jnp.bfloat16):
    """Pure-JAX reference using the same bf16-operand / f32-accumulate matmuls."""
    def mm(x, w):
        return jnp.dot(x.astype(compute_dtype), w.astype(compute_dtype),
                       preferred_element_type=jnp.float32)

    h1 = jnp.maximum(mm(features, params["w1"]) + params["b1"][0], 0.0)
    h2 = jnp.maximum(mm(h1, params["w2"]) + params["b2"][0], 0.0)
    mask = jax.nn.sigmoid(mm(h2, params["w3"]) + params["b3"][0])   # (B, T, F)
    return mixture_spec * jnp.transpose(mask, (0, 2, 1))


if __name__ == "__main__":
    B, T, input_dim, output_dim = 2, 8, 32, 16

    key = jax.random.PRNGKey(0)
    kf, km, kp = jax.random.split(key, 3)

    features = jax.random.normal(kf, (B, T, input_dim), jnp.float32)
    mixture_spec = jax.random.normal(km, (B, output_dim, T), jnp.float32)
    params = init_params(kp, input_dim, output_dim)

    out = jax.jit(linear_decoder)(features, mixture_spec, params)
    out = jax.block_until_ready(out)

    ref = reference(features, mixture_spec, params)
    assert out.shape == (B, output_dim, T)
    assert jnp.allclose(out, ref, atol=2e-2, rtol=2e-2), "mismatch vs reference"

    print("KERNEL_OK")
</pallas_src>

<mosaic_0001>
module attributes {stable_mosaic.version = 11 : i64} {
  func.func @_decoder_kernel(%arg0: i32, %arg1: memref<16x32xf32, #tpu.memory_space<vmem>>, %arg2: memref<16x128xf32, #tpu.memory_space<vmem>>, %arg3: memref<32x32xbf16, #tpu.memory_space<vmem>>, %arg4: memref<1x32xf32, #tpu.memory_space<vmem>>, %arg5: memref<32x128xbf16, #tpu.memory_space<vmem>>, %arg6: memref<1x128xf32, #tpu.memory_space<vmem>>, %arg7: memref<128x128xbf16, #tpu.memory_space<vmem>>, %arg8: memref<1x128xf32, #tpu.memory_space<vmem>>, %arg9: memref<16x128xf32, #tpu.memory_space<vmem>>) attributes {dimension_semantics = [#tpu.dimension_semantics<parallel>], iteration_bounds = array<i64: 1>, scalar_prefetch = 0 : i64, scratch_operands = 0 : i64, tpu.core_type = #tpu.core_type<tc>, window_params = [{transform_indices = @transform_0, window_bounds = array<i64: 16, 32>}, {transform_indices = @transform_1, window_bounds = array<i64: 16, 128>}, {pipeline_mode = #tpu.pipeline_mode<synchronous>, transform_indices = @transform_2, window_bounds = array<i64: 32, 32>}, {pipeline_mode = #tpu.pipeline_mode<synchronous>, transform_indices = @transform_3, window_bounds = array<i64: 1, 32>}, {pipeline_mode = #tpu.pipeline_mode<synchronous>, transform_indices = @transform_4, window_bounds = array<i64: 32, 128>}, {pipeline_mode = #tpu.pipeline_mode<synchronous>, transform_indices = @transform_5, window_bounds = array<i64: 1, 128>}, {pipeline_mode = #tpu.pipeline_mode<synchronous>, transform_indices = @transform_6, window_bounds = array<i64: 128, 128>}, {pipeline_mode = #tpu.pipeline_mode<synchronous>, transform_indices = @transform_7, window_bounds = array<i64: 1, 128>}, {transform_indices = @transform_8, window_bounds = array<i64: 16, 128>}]} {
    %c0 = arith.constant 0 : index
    %c0_0 = arith.constant 0 : index
    %0 = vector.load %arg1[%c0, %c0_0] : memref<16x32xf32, #tpu.memory_space<vmem>>, vector<16x32xf32>
    %1 = arith.truncf %0 : vector<16x32xf32> to vector<16x32xbf16>
    %c0_1 = arith.constant 0 : index
    %c0_2 = arith.constant 0 : index
    %2 = vector.load %arg3[%c0_1, %c0_2] : memref<32x32xbf16, #tpu.memory_space<vmem>>, vector<32x32xbf16>
    %cst = arith.constant dense<0.000000e+00> : vector<16x32xf32>
    %3 = tpu.matmul %1, %2, %cst {dimension_numbers = #tpu.dot_dimension_numbers<[1], [0], [0], [1], [0, 0, 1, 1], [], []>} : vector<16x32xbf16>, vector<32x32xbf16>, vector<16x32xf32> -> vector<16x32xf32>
    %c0_3 = arith.constant 0 : index
    %c0_4 = arith.constant 0 : index
    %4 = vector.load %arg4[%c0_3, %c0_4] : memref<1x32xf32, #tpu.memory_space<vmem>>, vector<1x32xf32>
    %5 = vector.broadcast %4 : vector<1x32xf32> to vector<16x32xf32>
    %6 = arith.addf %3, %5 : vector<16x32xf32>
    %cst_5 = arith.constant 0.000000e+00 : f32
    %7 = vector.broadcast %cst_5 : f32 to vector<16x32xf32>
    %8 = arith.maximumf %6, %7 : vector<16x32xf32>
    %9 = arith.truncf %8 : vector<16x32xf32> to vector<16x32xbf16>
    %c0_6 = arith.constant 0 : index
    %c0_7 = arith.constant 0 : index
    %10 = vector.load %arg5[%c0_6, %c0_7] : memref<32x128xbf16, #tpu.memory_space<vmem>>, vector<32x128xbf16>
    %cst_8 = arith.constant dense<0.000000e+00> : vector<16x128xf32>
    %11 = tpu.matmul %9, %10, %cst_8 {dimension_numbers = #tpu.dot_dimension_numbers<[1], [0], [0], [1], [0, 0, 1, 1], [], []>} : vector<16x32xbf16>, vector<32x128xbf16>, vector<16x128xf32> -> vector<16x128xf32>
    %c0_9 = arith.constant 0 : index
    %c0_10 = arith.constant 0 : index
    %12 = vector.load %arg6[%c0_9, %c0_10] : memref<1x128xf32, #tpu.memory_space<vmem>>, vector<1x128xf32>
    %13 = vector.broadcast %12 : vector<1x128xf32> to vector<16x128xf32>
    %14 = arith.addf %11, %13 : vector<16x128xf32>
    %cst_11 = arith.constant 0.000000e+00 : f32
    %15 = vector.broadcast %cst_11 : f32 to vector<16x128xf32>
    %16 = arith.maximumf %14, %15 : vector<16x128xf32>
    %17 = arith.truncf %16 : vector<16x128xf32> to vector<16x128xbf16>
    %c0_12 = arith.constant 0 : index
    %c0_13 = arith.constant 0 : index
    %18 = vector.load %arg7[%c0_12, %c0_13] : memref<128x128xbf16, #tpu.memory_space<vmem>>, vector<128x128xbf16>
    %cst_14 = arith.constant dense<0.000000e+00> : vector<16x128xf32>
    %19 = tpu.matmul %17, %18, %cst_14 {dimension_numbers = #tpu.dot_dimension_numbers<[1], [0], [0], [1], [0, 0, 1, 1], [], []>} : vector<16x128xbf16>, vector<128x128xbf16>, vector<16x128xf32> -> vector<16x128xf32>
    %c0_15 = arith.constant 0 : index
    %c0_16 = arith.constant 0 : index
    %20 = vector.load %arg8[%c0_15, %c0_16] : memref<1x128xf32, #tpu.memory_space<vmem>>, vector<1x128xf32>
    %21 = vector.broadcast %20 : vector<1x128xf32> to vector<16x128xf32>
    %22 = arith.addf %19, %21 : vector<16x128xf32>
    %23 = arith.negf %22 : vector<16x128xf32>
    %24 = math.exp %23 : vector<16x128xf32>
    %cst_17 = arith.constant 1.000000e+00 : f32
    %25 = vector.broadcast %cst_17 : f32 to vector<16x128xf32>
    %26 = arith.addf %25, %24 : vector<16x128xf32>
    %27 = arith.divf %25, %26 : vector<16x128xf32>
    %c0_18 = arith.constant 0 : index
    %c0_19 = arith.constant 0 : index
    %28 = vector.load %arg2[%c0_18, %c0_19] : memref<16x128xf32, #tpu.memory_space<vmem>>, vector<16x128xf32>
    %29 = arith.mulf %28, %27 : vector<16x128xf32>
    %c0_20 = arith.constant 0 : index
    %c0_21 = arith.constant 0 : index
    %30 = vector.load %arg9[%c0_20, %c0_21] : memref<16x128xf32, #tpu.memory_space<vmem>>, vector<16x128xf32>
    tpu.vector_store %arg9[%c0_20, %c0_21], %29 {strides = array<i32>} : memref<16x128xf32, #tpu.memory_space<vmem>>, vector<16x128xf32>,
    return
  }
  func.func @transform_0(%arg0: i32) -> (i32, i32) {
    %c0_i32 = arith.constant 0 : i32
    %c0_i32_0 = arith.constant 0 : i32
    return %arg0, %c0_i32 : i32, i32
  }
  func.func @transform_1(%arg0: i32) -> (i32, i32) {
    %c0_i32 = arith.constant 0 : i32
    %c0_i32_0 = arith.constant 0 : i32
    return %arg0, %c0_i32 : i32, i32
  }
  func.func @transform_2(%arg0: i32) -> (i32, i32) {
    %c0_i32 = arith.constant 0 : i32
    %c0_i32_0 = arith.constant 0 : i32
    %c0_i32_1 = arith.constant 0 : i32
    return %c0_i32, %c0_i32_0 : i32, i32
  }
  func.func @transform_3(%arg0: i32) -> (i32, i32) {
    %c0_i32 = arith.constant 0 : i32
    %c0_i32_0 = arith.constant 0 : i32
    %c0_i32_1 = arith.constant 0 : i32
    return %c0_i32, %c0_i32_0 : i32, i32
  }
  func.func @transform_4(%arg0: i32) -> (i32, i32) {
    %c0_i32 = arith.constant 0 : i32
    %c0_i32_0 = arith.constant 0 : i32
    %c0_i32_1 = arith.constant 0 : i32
    return %c0_i32, %c0_i32_0 : i32, i32
  }
  func.func @transform_5(%arg0: i32) -> (i32, i32) {
    %c0_i32 = arith.constant 0 : i32
    %c0_i32_0 = arith.constant 0 : i32
    %c0_i32_1 = arith.constant 0 : i32
    return %c0_i32, %c0_i32_0 : i32, i32
  }
  func.func @transform_6(%arg0: i32) -> (i32, i32) {
    %c0_i32 = arith.constant 0 : i32
    %c0_i32_0 = arith.constant 0 : i32
    %c0_i32_1 = arith.constant 0 : i32
    return %c0_i32, %c0_i32_0 : i32, i32
  }
  func.func @transform_7(%arg0: i32) -> (i32, i32) {
    %c0_i32 = arith.constant 0 : i32
    %c0_i32_0 = arith.constant 0 : i32
    %c0_i32_1 = arith.constant 0 : i32
    return %c0_i32, %c0_i32_0 : i32, i32
  }
  func.func @transform_8(%arg0: i32) -> (i32, i32) {
    %c0_i32 = arith.constant 0 : i32
    %c0_i32_0 = arith.constant 0 : i32
    return %arg0, %c0_i32 : i32, i32
  }
}

</mosaic_0001>

<llo_original>
// kernel: linear_decoder.1
$region0: #{linear_decoder.1}
  #allocation0 [shape = 'u32[]', space=smem, size = 0x4, offset = 0x4, fixed_abs, tag = 'smem constant byte address 0x4 - core index']
  #allocation1 [shape = 'u32[144,128]{1,0:T(1,128)}', space=vmem, size = 0x12000, scoped, tag = 'internal scratch']
  %s0 = inlined_call_operand.vmem [shape: f32[16,32], index: 0, kind: input, shape index: {}]
  %s1 = inlined_call_operand.vmem [shape: f32[16,128], index: 1, kind: input, shape index: {}]
  %s2 = inlined_call_operand.vmem [shape: bf16[32,32], index: 2, kind: input, shape index: {}]
  %s3 = inlined_call_operand.vmem [shape: f32[1,32], index: 3, kind: input, shape index: {}]
  %s4 = inlined_call_operand.vmem [shape: bf16[32,128], index: 4, kind: input, shape index: {}]
  %s5 = inlined_call_operand.vmem [shape: f32[1,128], index: 5, kind: input, shape index: {}]
  %s6 = inlined_call_operand.vmem [shape: bf16[128,128], index: 6, kind: input, shape index: {}]
  %s7 = inlined_call_operand.vmem [shape: f32[1,128], index: 7, kind: input, shape index: {}]
  %s8 = inlined_call_operand.vmem [shape: f32[16,128], index: 8, kind: output, shape index: {}]
  %s9 = sld [smem:[#allocation0]]
  $region42: #{linear_decoder.1} parent=0
    _
  %s11 = ssub.s32 1, %s9
  %s12 = scalar_select 0, %s11, %s9
  // Predicated region
  $region2: #{linear_decoder.1} parent=0 // pred_check
    _
  $region3: #{linear_decoder.1} parent=0 // pred_check_branch
    %14 = sbr.rel (0) target = $region5
  $region4: #{linear_decoder.1} parent=0 // pred_region
    _
  $region5: #{linear_decoder.1} parent=0 // pred_fallthru
    _
  // Predicated region
  $region6: #{linear_decoder.1} parent=0 // pred_check
    _
  $region7: #{linear_decoder.1} parent=0 // pred_check_branch
    %16 = sbr.rel (0) target = $region9
  $region8: #{linear_decoder.1} parent=0 // pred_region
    _
  $region9: #{linear_decoder.1} parent=0 // pred_fallthru
    _
  // Predicated region
  $region10: #{linear_decoder.1} parent=0 // pred_check
    _
  $region11: #{linear_decoder.1} parent=0 // pred_check_branch
    %18 = sbr.rel (0) target = $region13
  $region12: #{linear_decoder.1} parent=0 // pred_region
    _
  $region13: #{linear_decoder.1} parent=0 // pred_fallthru
    _
  // Predicated region
  $region14: #{linear_decoder.1} parent=0 // pred_check
    _
  $region15: #{linear_decoder.1} parent=0 // pred_check_branch
    %20 = sbr.rel (0) target = $region17
  $region16: #{linear_decoder.1} parent=0 // pred_region
    _
  $region17: #{linear_decoder.1} parent=0 // pred_fallthru
    _
  // Predicated region
  $region18: #{linear_decoder.1} parent=0 // pred_check
    _
  $region19: #{linear_decoder.1} parent=0 // pred_check_branch
    %22 = sbr.rel (0) target = $region21
  $region20: #{linear_decoder.1} parent=0 // pred_region
    _
  $region21: #{linear_decoder.1} parent=0 // pred_fallthru
    _
  // Predicated region
  $region22: #{linear_decoder.1} parent=0 // pred_check
    _
  $region23: #{linear_decoder.1} parent=0 // pred_check_branch
    %24 = sbr.rel (0) target = $region25
  $region24: #{linear_decoder.1} parent=0 // pred_region
    _
  $region25: #{linear_decoder.1} parent=0 // pred_fallthru
    _
  // Predicated region
  $region26: #{linear_decoder.1} parent=0 // pred_check
    _
  $region27: #{linear_decoder.1} parent=0 // pred_check_branch
    %26 = sbr.rel (0) target = $region29
  $region28: #{linear_decoder.1} parent=0 // pred_region
    _
  $region29: #{linear_decoder.1} parent=0 // pred_fallthru
    _
  // Predicated region
  $region30: #{linear_decoder.1} parent=0 // pred_check
    _
  $region31: #{linear_decoder.1} parent=0 // pred_check_branch
    %28 = sbr.rel (0) target = $region33
  $region32: #{linear_decoder.1} parent=0 // pred_region
    _
  $region33: #{linear_decoder.1} parent=0 // pred_fallthru
    _
  %v30 = vld [vmem:[%s0] sm:$0xff]
  %v31 = vld [vmem:[%s0 + $0x8] sm:$0xff]
  %v32 = vpack.c.bf16 %v31, %v30
  %v33 = vld [vmem:[%s2] sm:$0xf]
  %v34 = vld [vmem:[%s2 + $0x4] sm:$0xf]
  %v35 = vld [vmem:[%s2 + $0x8] sm:$0xf]
  %v36 = vld [vmem:[%s2 + $0xc] sm:$0xf]
  %v37 = vld [vmem:[%s3] sm:$0x1]
  %v39 = vlaneseq
  %v40 = vshrl.u32 %v39, 7
  %v41 = vsub.s32 0, %v40
  %v42 = vrot.slane %v37, %v41
  %v48 = vunpack.c.l.b16 %v33
  %v49 = vunpack.c.l.b16 %v34
  %v50 = vunpack.c.l.b16 %v35
  %v51 = vunpack.c.l.b16 %v36
  %v52 = vpack.c.b16 %v49, %v48
  %v53 = vpack.c.b16 %v51, %v50
  %vm56 = vcmask 261120
  %v58 = vsel %vm56, %v32, 0
  %60 = vmatprep.subr.bf16.mxu0 0
  %61 = vmatpush1.bf16.msra.mxu0 0
  %62 = vmatprep.subr.bf16.mxu0 0
  %63 = vmatpush1.bf16.msra.mxu0 0
  %64 = vmatprep.subr.bf16.mxu0 0
  %65 = vmatpush1.bf16.msra.mxu0 0
  %66 = vmatprep.subr.bf16.mxu0 0
  %67 = vmatpush1.bf16.msra.mxu0 0
  %68 = vmatprep.subr.bf16.mxu0 0
  %69 = vmatpush1.bf16.msra.mxu0 0
  %70 = vmatprep.subr.bf16.mxu0 0
  %71 = vmatpush1.bf16.msra.mxu0 0
  %72 = vmatprep.subr.bf16.mxu0 0
  %73 = vmatpush1.bf16.msra.mxu0 %v53
  %74 = vmatprep.subr.bf16.mxu0 0
  %75 = vmatpush1.bf16.msra.mxu0 %v52
  %76 = vmatprep.subr.bf16.mxu0 0
  %77 = vmatpush2.bf16.msra.mxu0 0
  %78 = vmatprep.subr.bf16.mxu0 0
  %79 = vmatpush2.bf16.msra.mxu0 0
  %80 = vmatprep.subr.bf16.mxu0 0
  %81 = vmatpush2.bf16.msra.mxu0 0
  %82 = vmatprep.subr.bf16.mxu0 0
  %83 = vmatpush2.bf16.msra.mxu0 0
  %84 = vmatprep.subr.bf16.mxu0 0
  %85 = vmatpush2.bf16.msra.mxu0 0
  %86 = vmatprep.subr.bf16.mxu0 0
  %87 = vmatpush2.bf16.msra.mxu0 0
  %88 = vmatprep.subr.bf16.mxu0 0
  %89 = vmatpush2.bf16.msra.mxu0 0
  %90 = vmatprep.subr.bf16.mxu0 0
  %91 = vmatpush2.bf16.msra.mxu0 0
  %92 = vmatprep.mubr.bf16.mxu0 0
  %93 = vmatmul.mubr.bf16.gmra.mxu0 %v58
  %v94 = vpop.f32.mrf.mxu0
  %v95 = vadd.f32 %v42, %v94
  %v96 = vpop.f32.mrf.mxu0
  %v97 = vpop.f32.mrf.mxu0
  %v98 = vadd.f32 %v42, %v97
  %v99 = vpop.f32.mrf.mxu0
  %100 = vdwg.mxu0
  %v101 = vmax.f32 %v95, 0.0
  %v102 = vmax.f32 %v98, 0.0
  %v103 = vpack.c.bf16 %v102, %v101
  %v104 = vld [vmem:[%s4] sm:$0xf]
  %v105 = vld [vmem:[%s4 + $0x4] sm:$0xf]
  %v106 = vld [vmem:[%s4 + $0x8] sm:$0xf]
  %v107 = vld [vmem:[%s4 + $0xc] sm:$0xf]
  %v108 = vld [vmem:[%s5] sm:$0x1]
  %v110 = vlaneseq
  %v111 = vshrl.u32 %v110, 7
  %v112 = vsub.s32 0, %v111
  %v113 = vrot.slane %v108, %v112
  %v119 = vunpack.c.l.b16 %v104
  %v120 = vunpack.c.l.b16 %v105
  %v121 = vunpack.c.l.b16 %v106
  %v122 = vunpack.c.l.b16 %v107
  %v123 = vpack.c.b16 %v120, %v119
  %v124 = vpack.c.b16 %v122, %v121
  %v128 = vsel %vm56, %v103, 0
  %130 = vmatprep.subr.bf16.mxu0 0
  %131 = vmatpush1.bf16.msra.mxu0 0
  %132 = vmatprep.subr.bf16.mxu0 0
  %133 = vmatpush1.bf16.msra.mxu0 0
  %134 = vmatprep.subr.bf16.mxu0 0
  %135 = vmatpush1.bf16.msra.mxu0 0
  %136 = vmatprep.subr.bf16.mxu0 0
  %137 = vmatpush1.bf16.msra.mxu0 0
  %138 = vmatprep.subr.bf16.mxu0 0
  %139 = vmatpush1.bf16.msra.mxu0 0
  %140 = vmatprep.subr.bf16.mxu0 0
  %141 = vmatpush1.bf16.msra.mxu0 0
  %142 = vmatprep.subr.bf16.mxu0 0
  %143 = vmatpush1.bf16.msra.mxu0 %v124
  %144 = vmatprep.subr.bf16.mxu0 0
  %145 = vmatpush1.bf16.msra.mxu0 %v123
  %146 = vmatprep.subr.bf16.mxu0 0
  %147 = vmatpush2.bf16.msra.mxu0 0
  %148 = vmatprep.subr.bf16.mxu0 0
  %149 = vmatpush2.bf16.msra.mxu0 0
  %150 = vmatprep.subr.bf16.mxu0 0
  %151 = vmatpush2.bf16.msra.mxu0 0
  %152 = vmatprep.subr.bf16.mxu0 0
  %153 = vmatpush2.bf16.msra.mxu0 0
  %154 = vmatprep.subr.bf16.mxu0 0
  %155 = vmatpush2.bf16.msra.mxu0 0
  %156 = vmatprep.subr.bf16.mxu0 0
  %157 = vmatpush2.bf16.msra.mxu0 0
  %158 = vmatprep.subr.bf16.mxu0 0
  %159 = vmatpush2.bf16.msra.mxu0 0
  %160 = vmatprep.subr.bf16.mxu0 0
  %161 = vmatpush2.bf16.msra.mxu0 0
  %162 = vmatprep.mubr.bf16.mxu0 0
  %163 = vmatmul.mubr.bf16.gmra.mxu0 %v128
  %v164 = vpop.f32.mrf.mxu0
  %v165 = vadd.f32 %v113, %v164
  %v166 = vpop.f32.mrf.mxu0
  %v167 = vpop.f32.mrf.mxu0
  %v168 = vadd.f32 %v113, %v167
  %v169 = vpop.f32.mrf.mxu0
  %170 = vdwg.mxu0
  %v171 = vmax.f32 %v165, 0.0
  %v172 = vmax.f32 %v168, 0.0
  %v173 = vpack.c.bf16 %v172, %v171
  %v174 = vld [vmem:[%s6] sm:$0xf]
  %v175 = vld [vmem:[%s6 + $0x4] sm:$0xf]
  %v176 = vld [vmem:[%s6 + $0x8] sm:$0xf]
  %v177 = vld [vmem:[%s6 + $0xc] sm:$0xf]
  %v178 = vld [vmem:[%s6 + $0x10] sm:$0xf]
  %v179 = vld [vmem:[%s6 + $0x14] sm:$0xf]
  %v180 = vld [vmem:[%s6 + $0x18] sm:$0xf]
  %v181 = vld [vmem:[%s6 + $0x1c] sm:$0xf]
  %v182 = vld [vmem:[%s6 + $0x20] sm:$0xf]
  %v183 = vld [vmem:[%s6 + $0x24] sm:$0xf]
  %v184 = vld [vmem:[%s6 + $0x28] sm:$0xf]
  %v185 = vld [vmem:[%s6 + $0x2c] sm:$0xf]
  %v186 = vld [vmem:[%s6 + $0x30] sm:$0xf]
  %v187 = vld [vmem:[%s6 + $0x34] sm:$0xf]
  %v188 = vld [vmem:[%s6 + $0x38] sm:$0xf]
  %v189 = vld [vmem:[%s6 + $0x3c] sm:$0xf]
  %v190 = vld [vmem:[%s7] sm:$0x1]
  %v192 = vlaneseq
  %v193 = vshrl.u32 %v192, 7
  %v194 = vsub.s32 0, %v193
  %v195 = vrot.slane %v190, %v194
  %v213 = vunpack.c.l.b16 %v174
  %v214 = vunpack.c.l.b16 %v175
  %v215 = vunpack.c.l.b16 %v176
  %v216 = vunpack.c.l.b16 %v177
  %v217 = vunpack.c.l.b16 %v178
  %v218 = vunpack.c.l.b16 %v179
  %v219 = vunpack.c.l.b16 %v180
  %v220 = vunpack.c.l.b16 %v181
  %v221 = vunpack.c.l.b16 %v182
  %v222 = vunpack.c.l.b16 %v183
  %v223 = vunpack.c.l.b16 %v184
  %v224 = vunpack.c.l.b16 %v185
  %v225 = vunpack.c.l.b16 %v186
  %v226 = vunpack.c.l.b16 %v187
  %v227 = vunpack.c.l.b16 %v188
  %v228 = vunpack.c.l.b16 %v189
  %v229 = vpack.c.b16 %v214, %v213
  %v230 = vpack.c.b16 %v216, %v215
  %v231 = vpack.c.b16 %v218, %v217
  %v232 = vpack.c.b16 %v220, %v219
  %v233 = vpack.c.b16 %v222, %v221
  %v234 = vpack.c.b16 %v224, %v223
  %v235 = vpack.c.b16 %v226, %v225
  %v236 = vpack.c.b16 %v228, %v227
  %245 = vmatprep.subr.bf16.mxu0 0
  %246 = vmatpush1.bf16.msra.mxu0 %v236
  %247 = vmatprep.subr.bf16.mxu0 0
  %248 = vmatpush1.bf16.msra.mxu0 %v235
  %249 = vmatprep.subr.bf16.mxu0 0
  %250 = vmatpush1.bf16.msra.mxu0 %v234
  %251 = vmatprep.subr.bf16.mxu0 0
  %252 = vmatpush1.bf16.msra.mxu0 %v233
  %253 = vmatprep.subr.bf16.mxu0 0
  %254 = vmatpush1.bf16.msra.mxu0 %v232
  %255 = vmatprep.subr.bf16.mxu0 0
  %256 = vmatpush1.bf16.msra.mxu0 %v231
  %257 = vmatprep.subr.bf16.mxu0 0
  %258 = vmatpush1.bf16.msra.mxu0 %v230
  %259 = vmatprep.subr.bf16.mxu0 0
  %260 = vmatpush1.bf16.msra.mxu0 %v229
  %261 = vmatprep.subr.bf16.mxu0 0
  %262 = vmatpush2.bf16.msra.mxu0 0
  %263 = vmatprep.subr.bf16.mxu0 0
  %264 = vmatpush2.bf16.msra.mxu0 0
  %265 = vmatprep.subr.bf16.mxu0 0
  %266 = vmatpush2.bf16.msra.mxu0 0
  %267 = vmatprep.subr.bf16.mxu0 0
  %268 = vmatpush2.bf16.msra.mxu0 0
  %269 = vmatprep.subr.bf16.mxu0 0
  %270 = vmatpush2.bf16.msra.mxu0 0
  %271 = vmatprep.subr.bf16.mxu0 0
  %272 = vmatpush2.bf16.msra.mxu0 0
  %273 = vmatprep.subr.bf16.mxu0 0
  %274 = vmatpush2.bf16.msra.mxu0 0
  %275 = vmatprep.subr.bf16.mxu0 0
  %276 = vmatpush2.bf16.msra.mxu0 0
  %277 = vmatprep.mubr.bf16.mxu0 0
  %278 = vmatmul.mubr.bf16.gmra.mxu0 %v173
  %v279 = vpop.f32.mrf.mxu0
  %v280 = vadd.f32 %v195, %v279
  %v281 = vpop.f32.mrf.mxu0
  %v282 = vpop.f32.mrf.mxu0
  %v283 = vadd.f32 %v195, %v282
  %v284 = vpop.f32.mrf.mxu0
  %285 = vdwg.mxu0
  %v286 = vxor.u32 %v280, 2147483648
  %v287 = vxor.u32 %v283, 2147483648
  %v288 = vmul.f32 %v286, 1.442695
  %v289 = vpow.pop %v288
  %v290 = vmul.f32 %v287, 1.442695
  %v291 = vpow.pop %v290
  %v292 = vadd.f32 %v289, 1.0
  %v293 = vadd.f32 %v291, 1.0
  %v294 = vrcp.pop %v292
  %v295 = vmul.f32 1.0, %v294
  %v296 = vrcp.pop %v293
  %v297 = vmul.f32 1.0, %v296
  %v298 = vld [vmem:[%s1] sm:$0xff]
  %v299 = vld [vmem:[%s1 + $0x8] sm:$0xff]
  %v300 = vmul.f32 %v298, %v295
  %v301 = vmul.f32 %v299, %v297
  %302 = vst [vmem:[%s8] sm:$0xff] %v300
  %303 = vst [vmem:[%s8 + $0x8] sm:$0xff] %v301
  // Predicated region
  $region34: #{linear_decoder.1} parent=0 // pred_check
    _
  $region35: #{linear_decoder.1} parent=0 // pred_check_branch
    %305 = sbr.rel (0) target = $region37
  $region36: #{linear_decoder.1} parent=0 // pred_region
    _
  $region37: #{linear_decoder.1} parent=0 // pred_fallthru
    _
  // Predicated region
  $region38: #{linear_decoder.1} parent=0 // pred_check
    _
  $region39: #{linear_decoder.1} parent=0 // pred_check_branch
    %307 = sbr.rel (0) target = $region41
  $region40: #{linear_decoder.1} parent=0 // pred_region
    _
  $region41: #{linear_decoder.1} parent=0 // pred_fallthru
    _

</llo_original>
